<compile_context>
chip_gen: v7x
topology: tpu7x:2x2x1
jax: 0.10.0
libtpu: 0.0.40
codegen_flags: <defaults>
</compile_context>

<pallas_src>
import functools

import jax
import jax.numpy as jnp
from jax.experimental import pallas as pl
from jax.experimental.pallas import tpu as pltpu


def _encoder_kernel(p_ref, w_ref, b_ref, o_ref):
    # p_ref: [K, TL] bf16   w_ref: [F, K] bf16   b_ref: [F, 1] f32
    # o_ref: [F, TL] f32  (lane-dense along time)
    acc = jnp.dot(w_ref[...], p_ref[...], preferred_element_type=jnp.float32)
    o_ref[...] = jnp.maximum(acc + b_ref[...], 0.0).astype(o_ref.dtype)


@functools.partial(jax.jit, static_argnames=("sample_res",))
def adaptive_encoder_1d(s, weight, bias, *, sample_res):
    """s: [B, 1, n] f32; weight: [F, 1, K]; bias: [F] -> [B, F, L_out] f32."""
    B, _, n = s.shape
    F = weight.shape[0]
    K = sample_res
    stride = K // 2
    pad = K // 2

    L_out = (n + 2 * pad - K) // stride + 1

    # Lane tile: target ~2 MiB f32 output tiles, clamp to [512, 4096] lanes,
    # shrink to the 128-aligned full length for short signals.
    TL = max(512, min(4096, (2 * 1024 * 1024) // (4 * F)))
    TL = (TL // 128) * 128
    L_pad = ((L_out + 127) // 128) * 128
    if L_pad <= TL:
        TL = L_pad
    else:
        L_pad = ((L_out + TL - 1) // TL) * TL

    # --- glue: zero-pad + transposed im2col (taps -> sublanes, time -> lanes)
    x = s[:, 0, :].astype(jnp.float32)
    total = (L_pad - 1) * stride + K                 # samples needed
    x_pad = jnp.pad(x, ((0, 0), (pad, total - n - pad))).astype(jnp.bfloat16)
    # patches[b, k, t] = x_pad[b, t*stride + k]  (K strided slices, no gather)
    cols = [
        jax.lax.slice_in_dim(x_pad, k, k + (L_pad - 1) * stride + 1, stride, axis=1)
        for k in range(K)
    ]
    patches = jnp.stack(cols, axis=1)                # [B, K, L_pad] bf16

    w = weight.reshape(F, K).astype(jnp.bfloat16)    # [F, K]
    b = bias.reshape(F, 1).astype(jnp.float32)       # [F, 1]

    out = pl.pallas_call(
        _encoder_kernel,
        out_shape=jax.ShapeDtypeStruct((B, F, L_pad), jnp.float32),
        grid_spec=pltpu.PrefetchScalarGridSpec(
            num_scalar_prefetch=0,
            grid=(B, L_pad // TL),
            in_specs=[
                pl.BlockSpec((None, K, TL), lambda bi, j: (bi, 0, j)),
                pl.BlockSpec((F, K), lambda bi, j: (0, 0)),   # resident weight
                pl.BlockSpec((F, 1), lambda bi, j: (0, 0)),   # resident bias
            ],
            out_specs=pl.BlockSpec((None, F, TL), lambda bi, j: (bi, 0, j)),
        ),
        compiler_params=pltpu.CompilerParams(
            dimension_semantics=("parallel", "parallel"),
        ),
    )(patches, w, b)

    return out[:, :, :L_out]                          # [B, F, L_out], PyTorch layout


if __name__ == "__main__":
    # module hyper-params (small, consistent with the forward)
    freq_res = 32      # output channels F
    sample_res = 8     # kernel size K; stride = pad = 4
    batch = 2
    n_samples = 64

    key = jax.random.PRNGKey(0)
    k_x, k_w, k_b = jax.random.split(key, 3)

    # PyTorch Conv1d default init: U(-sqrt(k), sqrt(k)), k = 1/(in_ch*kernel)
    bound = (1.0 / (1 * sample_res)) ** 0.5
    weight = jax.random.uniform(
        k_w, (freq_res, 1, sample_res), jnp.float32, -bound, bound
    )
    bias = jax.random.uniform(k_b, (freq_res,), jnp.float32, -bound, bound)
    s = jax.random.normal(k_x, (batch, 1, n_samples), jnp.float32)

    out = adaptive_encoder_1d(s, weight, bias, sample_res=sample_res)
    out = jax.block_until_ready(out)

    # pure-JAX references
    stride = sample_res // 2
    pad = sample_res // 2
    L_out = (n_samples + 2 * pad - sample_res) // stride + 1
    x_pad = jnp.pad(s[:, 0, :], ((0, 0), (pad, pad)))
    idx = jnp.arange(L_out)[:, None] * stride + jnp.arange(sample_res)[None, :]
    w_mat = weight.reshape(freq_res, -1)

    # (a) bf16-rounded-input reference: isolates kernel correctness (tight tol)
    p_bf = x_pad[:, idx].astype(jnp.bfloat16).astype(jnp.float32)
    w_bf = w_mat.astype(jnp.bfloat16).astype(jnp.float32)
    ref_bf = jnp.maximum(
        jnp.einsum("blk,fk->bfl", p_bf, w_bf) + bias[None, :, None], 0.0
    )
    # (b) full-f32 reference: loose tolerance for the bf16 input cast
    ref_f32 = jnp.maximum(
        jnp.einsum("blk,fk->bfl", x_pad[:, idx], w_mat) + bias[None, :, None], 0.0
    )

    assert out.shape == (batch, freq_res, L_out), out.shape
    assert jnp.allclose(out, ref_bf, atol=1e-3, rtol=1e-3), float(
        jnp.max(jnp.abs(out - ref_bf))
    )
    assert jnp.allclose(out, ref_f32, atol=5e-2, rtol=5e-2), float(
        jnp.max(jnp.abs(out - ref_f32))
    )

    print("KERNEL_OK")
</pallas_src>

<mosaic_0001>
module attributes {stable_mosaic.version = 11 : i64} {
  func.func @_encoder_kernel(%arg0: i32, %arg1: i32, %arg2: memref<1x8x128xbf16, #tpu.memory_space<vmem>>, %arg3: memref<32x8xbf16, #tpu.memory_space<vmem>>, %arg4: memref<32x1xf32, #tpu.memory_space<vmem>>, %arg5: memref<1x32x128xf32, #tpu.memory_space<vmem>>) attributes {dimension_semantics = [#tpu.dimension_semantics<parallel>, #tpu.dimension_semantics<parallel>], iteration_bounds = array<i64: 2, 1>, scalar_prefetch = 0 : i64, scratch_operands = 0 : i64, tpu.core_type = #tpu.core_type<tc>, window_params = [{transform_indices = @transform_0, window_bounds = array<i64: 1, 8, 128>}, {pipeline_mode = #tpu.pipeline_mode<synchronous>, transform_indices = @transform_1, window_bounds = array<i64: 32, 8>}, {pipeline_mode = #tpu.pipeline_mode<synchronous>, transform_indices = @transform_2, window_bounds = array<i64: 32, 1>}, {transform_indices = @transform_3, window_bounds = array<i64: 1, 32, 128>}]} {
    %c0 = arith.constant 0 : index
    %c0_0 = arith.constant 0 : index
    %0 = vector.load %arg3[%c0, %c0_0] : memref<32x8xbf16, #tpu.memory_space<vmem>>, vector<32x8xbf16>
    %c0_1 = arith.constant 0 : index
    %c0_2 = arith.constant 0 : index
    %c0_3 = arith.constant 0 : index
    %1 = vector.load %arg2[%c0_1, %c0_2, %c0_3] : memref<1x8x128xbf16, #tpu.memory_space<vmem>>, vector<1x8x128xbf16>
    %2 = vector.shape_cast %1 : vector<1x8x128xbf16> to vector<8x128xbf16>
    %cst = arith.constant dense<0.000000e+00> : vector<32x128xf32>
    %3 = tpu.matmul %0, %2, %cst {dimension_numbers = #tpu.dot_dimension_numbers<[1], [0], [0], [1], [0, 0, 1, 1], [], []>} : vector<32x8xbf16>, vector<8x128xbf16>, vector<32x128xf32> -> vector<32x128xf32>
    %c0_4 = arith.constant 0 : index
    %c0_5 = arith.constant 0 : index
    %4 = vector.load %arg4[%c0_4, %c0_5] : memref<32x1xf32, #tpu.memory_space<vmem>>, vector<32x1xf32>
    %5 = vector.broadcast %4 : vector<32x1xf32> to vector<32x128xf32>
    %6 = arith.addf %3, %5 : vector<32x128xf32>
    %cst_6 = arith.constant 0.000000e+00 : f32
    %7 = vector.broadcast %cst_6 : f32 to vector<32x128xf32>
    %8 = arith.maximumf %6, %7 : vector<32x128xf32>
    %c0_7 = arith.constant 0 : index
    %c0_8 = arith.constant 0 : index
    %c0_9 = arith.constant 0 : index
    %9 = vector.load %arg5[%c0_7, %c0_8, %c0_9] : memref<1x32x128xf32, #tpu.memory_space<vmem>>, vector<1x32x128xf32>
    %10 = vector.shape_cast %9 : vector<1x32x128xf32> to vector<32x128xf32>
    %11 = vector.shape_cast %8 : vector<32x128xf32> to vector<1x32x128xf32>
    tpu.vector_store %arg5[%c0_7, %c0_8, %c0_9], %11 {strides = array<i32>} : memref<1x32x128xf32, #tpu.memory_space<vmem>>, vector<1x32x128xf32>,
    return
  }
  func.func @transform_0(%arg0: i32, %arg1: i32) -> (i32, i32, i32) {
    %c0_i32 = arith.constant 0 : i32
    %c0_i32_0 = arith.constant 0 : i32
    return %arg0, %c0_i32, %arg1 : i32, i32, i32
  }
  func.func @transform_1(%arg0: i32, %arg1: i32) -> (i32, i32) {
    %c0_i32 = arith.constant 0 : i32
    %c0_i32_0 = arith.constant 0 : i32
    %c0_i32_1 = arith.constant 0 : i32
    return %c0_i32, %c0_i32_0 : i32, i32
  }
  func.func @transform_2(%arg0: i32, %arg1: i32) -> (i32, i32) {
    %c0_i32 = arith.constant 0 : i32
    %c0_i32_0 = arith.constant 0 : i32
    %c0_i32_1 = arith.constant 0 : i32
    return %c0_i32, %c0_i32_0 : i32, i32
  }
  func.func @transform_3(%arg0: i32, %arg1: i32) -> (i32, i32, i32) {
    %c0_i32 = arith.constant 0 : i32
    %c0_i32_0 = arith.constant 0 : i32
    return %arg0, %c0_i32, %arg1 : i32, i32, i32
  }
}

</mosaic_0001>

<llo_original>
// kernel: adaptive_encoder_1d.1
$region0: #{adaptive_encoder_1d.1}
  #allocation0 [shape = 'u32[]', space=smem, size = 0x4, offset = 0x4, fixed_abs, tag = 'smem constant byte address 0x4 - core index']
  #allocation1 [shape = 'u32[144,128]{1,0:T(1,128)}', space=vmem, size = 0x12000, scoped, tag = 'internal scratch']
  %s0 = inlined_call_operand.vmem [shape: bf16[2,8,128], index: 0, kind: input, shape index: {}]
  %s1 = inlined_call_operand.vmem [shape: bf16[32,8], index: 1, kind: input, shape index: {}]
  %s2 = inlined_call_operand.vmem [shape: f32[32,1], index: 2, kind: input, shape index: {}]
  %s3 = inlined_call_operand.vmem [shape: f32[2,32,128], index: 3, kind: output, shape index: {}]
  %s4 = sld [smem:[#allocation0]]
  $region45: #{adaptive_encoder_1d.1} parent=0
    _
  %s6 = ssub.s32 1, %s4
  %s7 = scalar_select 0, %s6, %s4
  loop: start=0, step=1, limit=4
  $region2: #{adaptive_encoder_1d.1} parent=0 // loop_pre_header
    _
  $region3: #{adaptive_encoder_1d.1} parent=0 // loop_header
    %s9 = sphi 0, %s13
    %p10 = scmp.ge.s32.totalorder %s9, 4
    %s16 = sphi 0, %s28
    %s17 = sphi 0, %s24
    %s18 = sphi 0, %s16
    %s19 = sphi 0, %s17
    %s20 = sphi 0, %s18
    %s21 = sphi 0, %s19
    %s33 = sphi 0, %s35
    %s36 = sphi 0, %s33
    %s37 = sphi 0, %s36
    %s53 = sphi 0, %s37
    %s57 = sphi 0, %s57
    %s59 = sphi 0, %s57
    %s60 = sphi 0, %s59
    %s74 = sphi 0, %s60
    %s78 = sphi 0, %s78
    %s80 = sphi 0, %s78
    %s81 = sphi 0, %s80
    %s95 = sphi 0, %s81
    %s103 = sphi 0, %s105
    %s106 = sphi 0, %s103
    %s107 = sphi 0, %s106
    %s123 = sphi 0, %s107
  $region4: #{adaptive_encoder_1d.1} parent=0 // loop_header_branch
    %12 = sbr.rel (%p10) target = $region8
  $region5: #{adaptive_encoder_1d.1} parent=0 // loop_body
    %s14 = ssub.s32 %s9, 1
    %s15 = ssub.s32 %s9, 2
    %s22 = sadd.s32 1, %s17
    %p23 = scmp.ge.s32.totalorder %s22, 1
    %s24 = scalar_select %p23, 0, %s22
    %s25 = sadd.s32 1, %s16
    %s26 = scalar_select %p23, %s25, %s16
    %p27 = scmp.ge.s32.totalorder %s26, 2
    %s28 = scalar_select %p27, 0, %s26
    %s29 = ssub.s32 %s16, %s28
    %s30 = ssub.s32 %s17, %s24
    %s31 = sor.u32 %s29, %s30
    %p32 = scmp.eq.s32.totalorder %s31, 0
    %s34 = sadd.s32 %s33, 1
    %s35 = scalar_select %p32, %s33, %s34
    %p38 = pneg %p32
    %p39 = scmp.eq.s32.totalorder %s9, 1
    %p40 = por %p38, %p39
    %p41 = scmp.ne.s32.totalorder %s33, %s36
    %p42 = scmp.eq.s32.totalorder %s9, 0
    %p43 = por %p41, %p42
    %p44 = scmp.ne.s32.totalorder %s33, %s36
    %p45 = scmp.eq.s32.totalorder %s14, 1
    %p46 = por %p44, %p45
    %p47 = scmp.ne.s32.totalorder %s36, %s37
    %p48 = scmp.eq.s32.totalorder %s14, 0
    %p49 = por %p47, %p48
    %p50 = scmp.ne.s32.totalorder %s36, %s37
    %p51 = scmp.eq.s32.totalorder %s15, 1
    %p52 = por %p50, %p51
    %p54 = scmp.ne.s32.totalorder %s37, %s53
    %p55 = scmp.eq.s32.totalorder %s15, 0
    %p56 = por %p54, %p55
    %s58 = sadd.s32 %s57, 1
    %p61 = scmp.eq.s32.totalorder %s9, 1
    %p62 = scmp.ne.s32.totalorder %s57, %s59
    %p63 = scmp.eq.s32.totalorder %s9, 0
    %p64 = por %p62, %p63
    %p65 = scmp.ne.s32.totalorder %s57, %s59
    %p66 = scmp.eq.s32.totalorder %s14, 1
    %p67 = por %p65, %p66
    %p68 = scmp.ne.s32.totalorder %s59, %s60
    %p69 = scmp.eq.s32.totalorder %s14, 0
    %p70 = por %p68, %p69
    %p71 = scmp.ne.s32.totalorder %s59, %s60
    %p72 = scmp.eq.s32.totalorder %s15, 1
    %p73 = por %p71, %p72
    %p75 = scmp.ne.s32.totalorder %s60, %s74
    %p76 = scmp.eq.s32.totalorder %s15, 0
    %p77 = por %p75, %p76
    %s79 = sadd.s32 %s78, 1
    %p82 = scmp.eq.s32.totalorder %s9, 1
    %p83 = scmp.ne.s32.totalorder %s78, %s80
    %p84 = scmp.eq.s32.totalorder %s9, 0
    %p85 = por %p83, %p84
    %p86 = scmp.ne.s32.totalorder %s78, %s80
    %p87 = scmp.eq.s32.totalorder %s14, 1
    %p88 = por %p86, %p87
    %p89 = scmp.ne.s32.totalorder %s80, %s81
    %p90 = scmp.eq.s32.totalorder %s14, 0
    %p91 = por %p89, %p90
    %p92 = scmp.ne.s32.totalorder %s80, %s81
    %p93 = scmp.eq.s32.totalorder %s15, 1
    %p94 = por %p92, %p93
    %p96 = scmp.ne.s32.totalorder %s81, %s95
    %p97 = scmp.eq.s32.totalorder %s15, 0
    %p98 = por %p96, %p97
    %s99 = ssub.s32 %s16, %s28
    %s100 = ssub.s32 %s17, %s24
    %s101 = sor.u32 %s99, %s100
    %p102 = scmp.eq.s32.totalorder %s101, 0
    %s104 = sadd.s32 %s103, 1
    %s105 = scalar_select %p102, %s103, %s104
    %p108 = pneg %p102
    %p109 = scmp.eq.s32.totalorder %s9, 1
    %p110 = por %p108, %p109
    %p111 = scmp.ne.s32.totalorder %s103, %s106
    %p112 = scmp.eq.s32.totalorder %s9, 0
    %p113 = por %p111, %p112
    %p114 = scmp.ne.s32.totalorder %s103, %s106
    %p115 = scmp.eq.s32.totalorder %s14, 1
    %p116 = por %p114, %p115
    %p117 = scmp.ne.s32.totalorder %s106, %s107
    %p118 = scmp.eq.s32.totalorder %s14, 0
    %p119 = por %p117, %p118
    %p120 = scmp.ne.s32.totalorder %s106, %s107
    %p121 = scmp.eq.s32.totalorder %s15, 1
    %p122 = por %p120, %p121
    %p124 = scmp.ne.s32.totalorder %s107, %s123
    %p125 = scmp.eq.s32.totalorder %s15, 0
    %p126 = por %p124, %p125
    %p127 = scmp.le.s32.totalorder 1, %s9
    %p128 = scmp.lt.s32.totalorder %s9, 3
    %p129 = pnand %p127, %p128
    %p130 = pneg %p129
    // Predicated region
    $region9: #{adaptive_encoder_1d.1} parent=5 // pred_check
      _
    $region10: #{adaptive_encoder_1d.1} parent=5 // pred_check_branch
      %132 = sbr.rel (%p129) target = $region12
    $region11: #{adaptive_encoder_1d.1} parent=5 // pred_region
      %s133 = ssub.s32 %s9, 1
      // Predicated region
      $region13: #{adaptive_encoder_1d.1} parent=11 // pred_check
        %p134 = pneg %p70
      $region14: #{adaptive_encoder_1d.1} parent=11 // pred_check_branch
        %136 = sbr.rel (%p134) target = $region16
      $region15: #{adaptive_encoder_1d.1} parent=11 // pred_region
        _
      $region16: #{adaptive_encoder_1d.1} parent=11 // pred_fallthru
        _
      // Predicated region
      $region17: #{adaptive_encoder_1d.1} parent=11 // pred_check
        %p137 = pneg %p91
      $region18: #{adaptive_encoder_1d.1} parent=11 // pred_check_branch
        %139 = sbr.rel (%p137) target = $region20
      $region19: #{adaptive_encoder_1d.1} parent=11 // pred_region
        _
      $region20: #{adaptive_encoder_1d.1} parent=11 // pred_fallthru
        _
    $region12: #{adaptive_encoder_1d.1} parent=5 // pred_fallthru
      _
    %p140 = scmp.lt.s32.totalorder %s9, 2
    // Predicated region
    $region21: #{adaptive_encoder_1d.1} parent=5 // pred_check
      %p141 = pneg %p140
    $region22: #{adaptive_encoder_1d.1} parent=5 // pred_check_branch
      %143 = sbr.rel (%p141) target = $region24
    $region23: #{adaptive_encoder_1d.1} parent=5 // pred_region
      // Predicated region
      $region25: #{adaptive_encoder_1d.1} parent=23 // pred_check
        %p144 = pneg %p43
      $region26: #{adaptive_encoder_1d.1} parent=23 // pred_check_branch
        %146 = sbr.rel (%p144) target = $region28
      $region27: #{adaptive_encoder_1d.1} parent=23 // pred_region
        %p147 = scmp.lt.s32.totalorder %s16, 1
        %s148 = scalar_select %p147, %s16, 1
        %p149 = scmp.lt.s32.totalorder %s17, 0
        %s150 = scalar_select %p149, %s17, 0
        %s151 = sadd.s32 %s150, %s148
        %s152 = smul.addr %s151, 4
        %s153 = scalar_lea.vmem %s0, %s152
      $region28: #{adaptive_encoder_1d.1} parent=23 // pred_fallthru
        _
    $region24: #{adaptive_encoder_1d.1} parent=5 // pred_fallthru
      _
    %p154 = scmp.le.s32.totalorder 1, %s9
    %p155 = scmp.lt.s32.totalorder %s9, 3
    %p156 = pnand %p154, %p155
    %p157 = pneg %p156
    // Predicated region
    $region29: #{adaptive_encoder_1d.1} parent=5 // pred_check
      _
    $region30: #{adaptive_encoder_1d.1} parent=5 // pred_check_branch
      %159 = sbr.rel (%p156) target = $region32
    $region31: #{adaptive_encoder_1d.1} parent=5 // pred_region
      %s160 = ssub.s32 %s9, 1
      %p161 = scmp.lt.s32.totalorder %s18, 1
      %s162 = scalar_select %p161, %s18, 1
      %p163 = scmp.lt.s32.totalorder %s19, 0
      %s164 = scalar_select %p163, %s19, 0
      %s165 = sadd.s32 %s164, %s162
      %s166 = smul.addr %s165, 4
      %s167 = scalar_lea.vmem %s0, %s166
      %p168 = pneg %p49
      %p169 = pneg %p46
      %p170 = pneg %p70
      %p171 = pneg %p67
      %p172 = pneg %p91
      %p173 = pneg %p88
      %p174 = pneg %p119
      %p175 = pneg %p116
      %p176 = scmp.lt.s32.totalorder %s18, 1
      %s177 = scalar_select %p176, %s18, 1
      %p178 = scmp.lt.s32.totalorder %s19, 0
      %s179 = scalar_select %p178, %s19, 0
      %s180 = smul.addr %s177, 4
      %s181 = sadd.s32 %s179, %s180
      %s182 = smul.addr %s181, 8
      %s183 = scalar_lea.vmem %s3, %s182
      %p184 = scmp.lt.s32.totalorder %s18, 1
      %s185 = scalar_select %p184, %s18, 1
      %p186 = scmp.lt.s32.totalorder %s19, 0
      %s187 = scalar_select %p186, %s19, 0
      %s188 = sadd.s32 %s187, %s185
      %s189 = smul.addr %s188, 4
      %s190 = scalar_lea.vmem %s0, %s189
      %p191 = scmp.lt.s32.totalorder %s18, 1
      %s192 = scalar_select %p191, %s18, 1
      %p193 = scmp.lt.s32.totalorder %s19, 0
      %s194 = scalar_select %p193, %s19, 0
      %s195 = smul.addr %s192, 4
      %s196 = sadd.s32 %s194, %s195
      %s197 = smul.addr %s196, 8
      %s198 = scalar_lea.vmem %s3, %s197
      %v200 = vld [vmem:[%s1] sm:$0xf]
      %v201 = vld [vmem:[%s1 + $0x4] sm:$0xf]
      %v202 = vld [vmem:[%s1 + $0x8] sm:$0xf]
      %v203 = vld [vmem:[%s1 + $0xc] sm:$0xf]
      %v204 = vld [vmem:[%s190] sm:$0xf]
      %v205 = vld [vmem:[%s2] sm:$0xff]
      %v206 = vld [vmem:[%s2 + $0x8] sm:$0xff]
      %v207 = vld [vmem:[%s2 + $0x10] sm:$0xff]
      %v208 = vld [vmem:[%s2 + $0x18] sm:$0xff]
      %210 = vset.pattern.permute.xlu0 0
      %211 = vperm.xlu0 %210, %v205
      %v212 = vpop.permute.xlu0 %211
      %215 = vset.pattern.permute.xlu0 0
      %216 = vperm.xlu0 %215, %v206
      %v217 = vpop.permute.xlu0 %216
      %220 = vset.pattern.permute.xlu0 0
      %221 = vperm.xlu0 %220, %v207
      %v222 = vpop.permute.xlu0 %221
      %225 = vset.pattern.permute.xlu0 0
      %226 = vperm.xlu0 %225, %v208
      %v227 = vpop.permute.xlu0 %226
      %v233 = vunpack.c.l.b16 %v200
      %v234 = vunpack.c.l.b16 %v201
      %v235 = vunpack.c.l.b16 %v202
      %v236 = vunpack.c.l.b16 %v203
      %v237 = vpack.c.b16 %v234, %v233
      %v238 = vpack.c.b16 %v236, %v235
      %vm239 = vcmask 64512
      %v241 = vsel %vm239, %v237, 0
      %v244 = vsel %vm239, %v238, 0
      %vm246 = vcmask 1043456
      %v248 = vsel %vm246, %v204, 0
      %250 = vmatprep.subr.bf16.mxu0 0
      %251 = vmatpush1.bf16.msra.mxu0 %v248
      %252 = vmatprep.subr.bf16.mxu0 0
      %253 = vmatpush1.bf16.msra.mxu0 0
      %254 = vmatprep.subr.bf16.mxu0 0
      %255 = vmatpush1.bf16.msra.mxu0 0
      %256 = vmatprep.subr.bf16.mxu0 0
      %257 = vmatpush1.bf16.msra.mxu0 0
      %258 = vmatprep.subr.bf16.mxu0 0
      %259 = vmatpush1.bf16.msra.mxu0 0
      %260 = vmatprep.subr.bf16.mxu0 0
      %261 = vmatpush1.bf16.msra.mxu0 0
      %262 = vmatprep.subr.bf16.mxu0 0
      %263 = vmatpush1.bf16.msra.mxu0 0
      %264 = vmatprep.subr.bf16.mxu0 0
      %265 = vmatpush1.bf16.msra.mxu0 0
      %266 = vmatprep.subr.bf16.mxu0 0
      %267 = vmatpush1.bf16.msra.mxu0 0
      %268 = vmatprep.subr.bf16.mxu0 0
      %269 = vmatpush1.bf16.msra.mxu0 0
      %270 = vmatprep.subr.bf16.mxu0 0
      %271 = vmatpush1.bf16.msra.mxu0 0
      %272 = vmatprep.subr.bf16.mxu0 0
      %273 = vmatpush1.bf16.msra.mxu0 0
      %274 = vmatprep.subr.bf16.mxu0 0
      %275 = vmatpush1.bf16.msra.mxu0 0
      %276 = vmatprep.subr.bf16.mxu0 0
      %277 = vmatpush1.bf16.msra.mxu0 0
      %278 = vmatprep.subr.bf16.mxu0 0
      %279 = vmatpush1.bf16.msra.mxu0 0
      %280 = vmatprep.subr.bf16.mxu0 0
      %281 = vmatpush1.bf16.msra.mxu0 0
      %282 = vmatprep.mubr.bf16.mxu0 0
      %283 = vmatmul.mubr.bf16.gmra.mrb[0].mxu0 %v241
      %v284 = vpop.f32.mrb[0].mxu0
      %v285 = vadd.f32 %v212, %v284
      %v286 = vpop.f32.mrb[0].mxu0
      %v287 = vpop.f32.mrb[0].mxu0
      %v288 = vadd.f32 %v217, %v287
      %v289 = vpop.f32.mrb[0].mxu0
      %290 = vmatprep.mubr.bf16.mxu0 0
      %291 = vmatmul.mubr.bf16.gmra.mrb[0].mxu0 %v244
      %v292 = vpop.f32.mrb[0].mxu0
      %v293 = vadd.f32 %v222, %v292
      %v294 = vpop.f32.mrb[0].mxu0
      %v295 = vpop.f32.mrb[0].mxu0
      %v296 = vadd.f32 %v227, %v295
      %v297 = vpop.f32.mrb[0].mxu0
      %298 = vdwg.mxu0
      %v299 = vmax.f32 %v285, 0.0
      %v300 = vmax.f32 %v288, 0.0
      %v301 = vmax.f32 %v293, 0.0
      %v302 = vmax.f32 %v296, 0.0
      %303 = vst [vmem:[%s198] sm:$0xff] %v299
      %304 = vst [vmem:[%s198 + $0x8] sm:$0xff] %v300
      %305 = vst [vmem:[%s198 + $0x10] sm:$0xff] %v301
      %306 = vst [vmem:[%s198 + $0x18] sm:$0xff] %v302
      %p307 = scmp.lt.s32.totalorder %s18, 1
      %s308 = scalar_select %p307, %s18, 1
      %p309 = scmp.lt.s32.totalorder %s19, 0
      %s310 = scalar_select %p309, %s19, 0
      %s311 = smul.addr %s308, 4
      %s312 = sadd.s32 %s310, %s311
      %s313 = smul.addr %s312, 8
      %s314 = scalar_lea.vmem %s3, %s313
      // Predicated region
      $region33: #{adaptive_encoder_1d.1} parent=31 // pred_check
        %p315 = pneg %p116
      $region34: #{adaptive_encoder_1d.1} parent=31 // pred_check_branch
        %317 = sbr.rel (%p315) target = $region36
      $region35: #{adaptive_encoder_1d.1} parent=31 // pred_region
        _
      $region36: #{adaptive_encoder_1d.1} parent=31 // pred_fallthru
        _
    $region32: #{adaptive_encoder_1d.1} parent=5 // pred_fallthru
      _
    %p318 = scmp.le.s32.totalorder 2, %s9
    // Predicated region
    $region37: #{adaptive_encoder_1d.1} parent=5 // pred_check
      %p319 = pneg %p318
    $region38: #{adaptive_encoder_1d.1} parent=5 // pred_check_branch
      %321 = sbr.rel (%p319) target = $region40
    $region39: #{adaptive_encoder_1d.1} parent=5 // pred_region
      %s322 = ssub.s32 %s9, 2
      // Predicated region
      $region41: #{adaptive_encoder_1d.1} parent=39 // pred_check
        %p323 = pneg %p122
      $region42: #{adaptive_encoder_1d.1} parent=39 // pred_check_branch
        %325 = sbr.rel (%p323) target = $region44
      $region43: #{adaptive_encoder_1d.1} parent=39 // pred_region
        %p326 = scmp.lt.s32.totalorder %s20, 1
        %s327 = scalar_select %p326, %s20, 1
        %p328 = scmp.lt.s32.totalorder %s21, 0
        %s329 = scalar_select %p328, %s21, 0
        %s330 = smul.addr %s327, 4
        %s331 = sadd.s32 %s329, %s330
        %s332 = smul.addr %s331, 8
        %s333 = scalar_lea.vmem %s3, %s332
      $region44: #{adaptive_encoder_1d.1} parent=39 // pred_fallthru
        _
    $region40: #{adaptive_encoder_1d.1} parent=5 // pred_fallthru
      _
  $region6: #{adaptive_encoder_1d.1} parent=0 // loop_footer
    %s13 = sadd.s32 1, %s9
  $region7: #{adaptive_encoder_1d.1} parent=0 // loop_footer_branch
    %8 = sbr.rel target = $region3
  $region8: #{adaptive_encoder_1d.1} parent=0 // loop_exit
    _

</llo_original>
